<compile_context>
chip_gen: v7x
topology: tpu7x:2x2x1
jax: 0.10.0
libtpu: 0.0.40
codegen_flags: <defaults>
</compile_context>

<pallas_src>
import functools
import math

import jax
import jax.numpy as jnp
from jax.experimental import pallas as pl
from jax.experimental.pallas import tpu as pltpu

_LANE = 128
_SUBLANE_F32 = 8
# Total per-grid-step VMEM working-set budget (double-buffered in/out + f32 temps).
_VMEM_WORKSET_BUDGET = 40 * 1024 * 1024


def _round_up(a, b):
    return (a + b - 1) // b * b


def _taylor_softmax_kernel(x_ref, o_ref, *, n):
    # x_ref / o_ref: (C, TILE_S).  Reduction over C (sublane axis); TILE_S rides
    # the 128-wide lane axis -> every VPU op and the reduce are lane-dense.
    x = x_ref[...].astype(jnp.float32)

    # fn = 1 + sum_{i=1..n} x^i / i!  (n is a static Python int -> fully unrolled;
    # factorial divides folded into constant multiplies).
    fn = 1.0 + x
    term = x
    denor = 1.0
    for i in range(2, n + 1):
        denor *= i
        term = term * x
        fn = fn + term * jnp.float32(1.0 / denor)

    denom = jnp.sum(fn, axis=0, keepdims=True)     # (1, TILE_S) sublane reduce
    inv = pl.reciprocal(denom, approx=True)        # EUP vrcp (otherwise-idle slot)
    inv = inv * (2.0 - denom * inv)                # one Newton step -> ~f32 accuracy
    o_ref[...] = (fn * inv).astype(o_ref.dtype)


def taylor_softmax(x, dim=1, n=2):
    """Pallas TPU implementation of TaylorSoftmax.forward (softmax over `dim`)."""
    assert n % 2 == 0 and n >= 2
    nd = x.ndim
    dim = dim % nd
    orig_shape = x.shape

    C = orig_shape[dim]
    B = int(math.prod(orig_shape[:dim]))         # leading dims flattened
    S = int(math.prod(orig_shape[dim + 1:]))     # trailing dims flattened (lane axis)
    x3 = x.reshape(B, C, S)

    itemsize = jnp.dtype(x.dtype).itemsize
    # Sublane rounding of the C axis for the real VMEM footprint.
    sublane_in = {4: 8, 2: 16, 1: 32}.get(itemsize, 8)
    c_pad_in = _round_up(C, sublane_in)
    c_pad_f32 = _round_up(C, _SUBLANE_F32)

    # Bytes per lane column of S held live per grid step:
    #   2x double-buffered input + 2x double-buffered output (input dtype),
    #   plus ~3 full-tile f32 temporaries (x, term, fn).
    per_col = 4 * c_pad_in * itemsize + 3 * c_pad_f32 * 4
    max_cols = max(_LANE, (_VMEM_WORKSET_BUDGET // per_col) // _LANE * _LANE)

    # Lane-dense trailing-axis tile, no host-side padding:
    # either a multiple of 128 (ragged last block, masked stores) or the full S extent.
    if S % _LANE == 0:
        tile_s = min(max_cols, S)
    elif S <= max_cols:
        tile_s = S                      # single full-extent block along S
    else:
        tile_s = max_cols               # ragged last block; OOB stores are masked
    num_s_tiles = pl.cdiv(S, tile_s)

    est_workset = per_col * tile_s
    vmem_limit = int(min(max(est_workset + 8 * 1024 * 1024, 32 * 1024 * 1024),
                         96 * 1024 * 1024))

    total_elems = B * C * S
    cost = pl.CostEstimate(
        flops=(2 * n + 2) * total_elems,
        transcendentals=0,
        bytes_accessed=2 * total_elems * itemsize,
    )

    kernel = functools.partial(_taylor_softmax_kernel, n=n)

    # Many-block S-tile axis leads the grid so v7x megacore shards over it
    # (B is typically tiny); both axes are independent -> "parallel".
    out = pl.pallas_call(
        kernel,
        out_shape=jax.ShapeDtypeStruct((B, C, S), x.dtype),
        grid=(num_s_tiles, B),
        in_specs=[pl.BlockSpec((pl.Squeezed(), C, tile_s), lambda s, b: (b, 0, s))],
        out_specs=pl.BlockSpec((pl.Squeezed(), C, tile_s), lambda s, b: (b, 0, s)),
        compiler_params=pltpu.CompilerParams(
            dimension_semantics=("parallel", "parallel"),
            vmem_limit_bytes=vmem_limit),
        cost_estimate=cost,
    )(x3)

    return out.reshape(orig_shape)   # (B, C, S) is contiguous w.r.t. orig -> free


def _reference(x, dim=1, n=2):
    fn = jnp.ones_like(x)
    denor = 1.0
    for i in range(1, n + 1):
        denor *= i
        fn = fn + jnp.power(x, i) / denor
    return fn / jnp.sum(fn, axis=dim, keepdims=True)


if __name__ == "__main__":
    key = jax.random.PRNGKey(0)
    # Canonical module usage: (batch, channels, H, W), softmax over dim=1.
    x = jax.random.normal(key, (2, 4, 16, 16), dtype=jnp.float32)

    out = taylor_softmax(x, dim=1, n=2)
    jax.block_until_ready(out)
    ref = _reference(x, dim=1, n=2)
    assert out.shape == x.shape
    assert jnp.allclose(out, ref, atol=1e-5, rtol=1e-5), float(jnp.max(jnp.abs(out - ref)))

    # Exercise n=4 and a trailing extent that is not a multiple of 128
    # (full-extent S block path, no host-side padding).
    x2 = jax.random.normal(jax.random.PRNGKey(1), (2, 8, 7, 9), dtype=jnp.float32)
    out2 = taylor_softmax(x2, dim=1, n=4)
    jax.block_until_ready(out2)
    ref2 = _reference(x2, dim=1, n=4)
    assert jnp.allclose(out2, ref2, atol=1e-5, rtol=1e-5), float(jnp.max(jnp.abs(out2 - ref2)))

    print("KERNEL_OK")
</pallas_src>

<mosaic_0001>
module attributes {stable_mosaic.version = 11 : i64} {
  func.func @_taylor_softmax_kernel(%arg0: i32, %arg1: i32, %arg2: memref<1x4x256xf32, #tpu.memory_space<vmem>>, %arg3: memref<1x4x256xf32, #tpu.memory_space<vmem>>) attributes {dimension_semantics = [#tpu.dimension_semantics<parallel>, #tpu.dimension_semantics<parallel>], iteration_bounds = array<i64: 1, 2>, scalar_prefetch = 0 : i64, scratch_operands = 0 : i64, tpu.core_type = #tpu.core_type<tc>, window_params = [{transform_indices = @transform_0, window_bounds = array<i64: 1, 4, 256>}, {transform_indices = @transform_1, window_bounds = array<i64: 1, 4, 256>}]} {
    %c0 = arith.constant 0 : index
    %c0_0 = arith.constant 0 : index
    %c0_1 = arith.constant 0 : index
    %0 = vector.load %arg2[%c0, %c0_0, %c0_1] : memref<1x4x256xf32, #tpu.memory_space<vmem>>, vector<1x4x256xf32>
    %1 = vector.shape_cast %0 : vector<1x4x256xf32> to vector<4x256xf32>
    %cst = arith.constant 1.000000e+00 : f32
    %2 = vector.broadcast %cst : f32 to vector<4x256xf32>
    %3 = arith.addf %2, %1 : vector<4x256xf32>
    %4 = arith.mulf %1, %1 : vector<4x256xf32>
    %cst_2 = arith.constant 5.000000e-01 : f32
    %5 = vector.broadcast %cst_2 : f32 to vector<4x256xf32>
    %6 = arith.mulf %4, %5 : vector<4x256xf32>
    %7 = arith.addf %3, %6 : vector<4x256xf32>
    %cst_3 = arith.constant dense<0.000000e+00> : vector<256xf32>
    %8 = vector.multi_reduction <add>, %7, %cst_3 [0] : vector<4x256xf32> to vector<256xf32>
    %9 = vector.shape_cast %8 : vector<256xf32> to vector<1x256xf32>
    %10 = tpu.reciprocal %9 {approx = true} : vector<1x256xf32> -> vector<1x256xf32>
    %11 = arith.mulf %9, %10 : vector<1x256xf32>
    %cst_4 = arith.constant 2.000000e+00 : f32
    %12 = vector.broadcast %cst_4 : f32 to vector<1x256xf32>
    %13 = arith.subf %12, %11 : vector<1x256xf32>
    %14 = arith.mulf %10, %13 : vector<1x256xf32>
    %15 = vector.broadcast %14 : vector<1x256xf32> to vector<4x256xf32>
    %16 = arith.mulf %7, %15 : vector<4x256xf32>
    %c0_5 = arith.constant 0 : index
    %c0_6 = arith.constant 0 : index
    %c0_7 = arith.constant 0 : index
    %17 = vector.load %arg3[%c0_5, %c0_6, %c0_7] : memref<1x4x256xf32, #tpu.memory_space<vmem>>, vector<1x4x256xf32>
    %18 = vector.shape_cast %17 : vector<1x4x256xf32> to vector<4x256xf32>
    %19 = vector.shape_cast %16 : vector<4x256xf32> to vector<1x4x256xf32>
    tpu.vector_store %arg3[%c0_5, %c0_6, %c0_7], %19 {strides = array<i32>} : memref<1x4x256xf32, #tpu.memory_space<vmem>>, vector<1x4x256xf32>,
    return
  }
  func.func @transform_0(%arg0: i32, %arg1: i32) -> (i32, i32, i32) {
    %c0_i32 = arith.constant 0 : i32
    %c0_i32_0 = arith.constant 0 : i32
    return %arg1, %c0_i32, %arg0 : i32, i32, i32
  }
  func.func @transform_1(%arg0: i32, %arg1: i32) -> (i32, i32, i32) {
    %c0_i32 = arith.constant 0 : i32
    %c0_i32_0 = arith.constant 0 : i32
    return %arg1, %c0_i32, %arg0 : i32, i32, i32
  }
}

</mosaic_0001>

<llo_original>
// kernel: tpu_custom_call.1
$region0: #{tpu_custom_call.1}
  #allocation0 [shape = 'u32[]', space=smem, size = 0x4, offset = 0x4, fixed_abs, tag = 'smem constant byte address 0x4 - core index']
  #allocation1 [shape = 'u32[144,128]{1,0:T(1,128)}', space=vmem, size = 0x12000, scoped, tag = 'internal scratch']
  %s0 = inlined_call_operand.hbm [shape: f32[2,4,256], index: 0, kind: input, shape index: {}]
  %s1 = inlined_call_operand.hbm [shape: f32[2,4,256], index: 1, kind: output, shape index: {}]
  %s2 = sld [smem:[#allocation0]]
  $region41: #{tpu_custom_call.1} parent=0
    _
  %s4 = ssub.s32 1, %s2
  %s5 = scalar_select 0, %s4, %s2
  $region1: #{tpu_custom_call.1} parent=0
    #allocation2 [shape = 'u8[8192]{0}', space=vmem, size = 0x2000, scoped, tag = 'input window, operand 0']
    #allocation3 [shape = 's32[2]{0}', space=sflag, size = 0x8, scoped, tag = 'scoped memory for tpu_custom_call.1']
    #allocation4 [shape = 's32[2]{0}', space=sflag, size = 0x8, scoped, tag = 'scoped memory for tpu_custom_call.1']
    #allocation5 [shape = 'u8[8192]{0}', space=vmem, size = 0x2000, scoped, tag = 'output window, operand 0']
    %6 = vsyncpa [#allocation3], 0
    %s7 = scalar_lea.sflag [#allocation3], 1
    %8 = vsyncpa %s7, 0
    %9 = vsyncpa [#allocation4], 0
    %s10 = scalar_lea.sflag [#allocation4], 1
    %11 = vsyncpa %s10, 0
    loop: start=0, step=1, limit=4
    $region2: #{tpu_custom_call.1} parent=1 // loop_pre_header
      _
    $region3: #{tpu_custom_call.1} parent=1 // loop_header
      %s13 = sphi 0, %s17
      %p14 = scmp.ge.s32.totalorder %s13, 4
      %s20 = sphi 0, %s32
      %s21 = sphi 0, %s28
      %s22 = sphi 0, %s20
      %s23 = sphi 0, %s21
      %s24 = sphi 0, %s22
      %s25 = sphi 0, %s23
      %s37 = sphi 0, %s39
      %s40 = sphi 0, %s37
      %s41 = sphi 0, %s40
      %s57 = sphi 0, %s41
      %s65 = sphi 0, %s67
      %s68 = sphi 0, %s65
      %s69 = sphi 0, %s68
      %s85 = sphi 0, %s69
    $region4: #{tpu_custom_call.1} parent=1 // loop_header_branch
      %16 = sbr.rel (%p14) target = $region8
    $region5: #{tpu_custom_call.1} parent=1 // loop_body
      %s18 = ssub.s32 %s13, 1
      %s19 = ssub.s32 %s13, 2
      %s26 = sadd.s32 1, %s21
      %p27 = scmp.ge.s32.totalorder %s26, 2
      %s28 = scalar_select %p27, 0, %s26
      %s29 = sadd.s32 1, %s20
      %s30 = scalar_select %p27, %s29, %s20
      %p31 = scmp.ge.s32.totalorder %s30, 1
      %s32 = scalar_select %p31, 0, %s30
      %s33 = ssub.s32 %s21, %s28
      %s34 = ssub.s32 %s20, %s32
      %s35 = sor.u32 %s33, %s34
      %p36 = scmp.eq.s32.totalorder %s35, 0
      %s38 = sadd.s32 %s37, 1
      %s39 = scalar_select %p36, %s37, %s38
      %p42 = pneg %p36
      %p43 = scmp.eq.s32.totalorder %s13, 1
      %p44 = por %p42, %p43
      %p45 = scmp.ne.s32.totalorder %s37, %s40
      %p46 = scmp.eq.s32.totalorder %s13, 0
      %p47 = por %p45, %p46
      %p48 = scmp.ne.s32.totalorder %s37, %s40
      %p49 = scmp.eq.s32.totalorder %s18, 1
      %p50 = por %p48, %p49
      %p51 = scmp.ne.s32.totalorder %s40, %s41
      %p52 = scmp.eq.s32.totalorder %s18, 0
      %p53 = por %p51, %p52
      %p54 = scmp.ne.s32.totalorder %s40, %s41
      %p55 = scmp.eq.s32.totalorder %s19, 1
      %p56 = por %p54, %p55
      %p58 = scmp.ne.s32.totalorder %s41, %s57
      %p59 = scmp.eq.s32.totalorder %s19, 0
      %p60 = por %p58, %p59
      %s61 = ssub.s32 %s21, %s28
      %s62 = ssub.s32 %s20, %s32
      %s63 = sor.u32 %s61, %s62
      %p64 = scmp.eq.s32.totalorder %s63, 0
      %s66 = sadd.s32 %s65, 1
      %s67 = scalar_select %p64, %s65, %s66
      %p70 = pneg %p64
      %p71 = scmp.eq.s32.totalorder %s13, 1
      %p72 = por %p70, %p71
      %p73 = scmp.ne.s32.totalorder %s65, %s68
      %p74 = scmp.eq.s32.totalorder %s13, 0
      %p75 = por %p73, %p74
      %p76 = scmp.ne.s32.totalorder %s65, %s68
      %p77 = scmp.eq.s32.totalorder %s18, 1
      %p78 = por %p76, %p77
      %p79 = scmp.ne.s32.totalorder %s68, %s69
      %p80 = scmp.eq.s32.totalorder %s18, 0
      %p81 = por %p79, %p80
      %p82 = scmp.ne.s32.totalorder %s68, %s69
      %p83 = scmp.eq.s32.totalorder %s19, 1
      %p84 = por %p82, %p83
      %p86 = scmp.ne.s32.totalorder %s69, %s85
      %p87 = scmp.eq.s32.totalorder %s19, 0
      %p88 = por %p86, %p87
      %p89 = scmp.le.s32.totalorder 1, %s13
      %p90 = scmp.lt.s32.totalorder %s13, 3
      %p91 = pnand %p89, %p90
      %p92 = pneg %p91
      // Predicated region
      $region9: #{tpu_custom_call.1} parent=5 // pred_check
        _
      $region10: #{tpu_custom_call.1} parent=5 // pred_check_branch
        %94 = sbr.rel (%p91) target = $region12
      $region11: #{tpu_custom_call.1} parent=5 // pred_region
        %s95 = ssub.s32 %s13, 1
      $region12: #{tpu_custom_call.1} parent=5 // pred_fallthru
        _
      %p96 = scmp.lt.s32.totalorder %s13, 2
      // Predicated region
      $region13: #{tpu_custom_call.1} parent=5 // pred_check
        %p97 = pneg %p96
      $region14: #{tpu_custom_call.1} parent=5 // pred_check_branch
        %99 = sbr.rel (%p97) target = $region16
      $region15: #{tpu_custom_call.1} parent=5 // pred_region
        // Predicated region
        $region17: #{tpu_custom_call.1} parent=15 // pred_check
          %p100 = pneg %p47
        $region18: #{tpu_custom_call.1} parent=15 // pred_check_branch
          %102 = sbr.rel (%p100) target = $region20
        $region19: #{tpu_custom_call.1} parent=15 // pred_region
          %s103 = sand.u32 %s37, 1
          %s104 = scalar_lea.sflag [#allocation3], %s103
          %s105 = sand.u32 %s37, 1
          %s106 = smul.addr %s105, 8
          %s107 = scalar_lea.vmem [#allocation2], %s106
          %s108 = smul.u32 2, %s20
          %s110 = ssub.s32 128, 128
          %111 = vsyncadd %s104, %s110
          %s112 = smul.addr %s21, 2
          %s113 = sadd.s32 %s108, %s112
          %s114 = smul.addr %s113, 64
          %s115 = scalar_lea.hbm %s0, %s114
          %s117 = sshll.u32 %s107, 4
          %s118 = int_to_ptr.vmem [resolvable:$true] %s117
          %120 = dma.hbm_to_vmem [thread:$0]  %s115, 128, %s118, %s104
        $region20: #{tpu_custom_call.1} parent=15 // pred_fallthru
          _
      $region16: #{tpu_custom_call.1} parent=5 // pred_fallthru
        _
      %p121 = scmp.le.s32.totalorder 1, %s13
      %p122 = scmp.lt.s32.totalorder %s13, 3
      %p123 = pnand %p121, %p122
      %p124 = pneg %p123
      // Predicated region
      $region21: #{tpu_custom_call.1} parent=5 // pred_check
        _
      $region22: #{tpu_custom_call.1} parent=5 // pred_check_branch
        %126 = sbr.rel (%p123) target = $region24
      $region23: #{tpu_custom_call.1} parent=5 // pred_region
        %s127 = ssub.s32 %s13, 1
        %s128 = sand.u32 %s40, 1
        %s129 = scalar_lea.sflag [#allocation3], %s128
        %s130 = sand.u32 %s40, 1
        %s131 = smul.addr %s130, 8
        %s132 = scalar_lea.vmem [#allocation2], %s131
        // Predicated region
        $region25: #{tpu_custom_call.1} parent=23 // pred_check
          %p133 = pneg %p53
        $region26: #{tpu_custom_call.1} parent=23 // pred_check_branch
          %135 = sbr.rel (%p133) target = $region28
        $region27: #{tpu_custom_call.1} parent=23 // pred_region
          %136 = dma.done %s129, 128
        $region28: #{tpu_custom_call.1} parent=23 // pred_fallthru
          _
        %s137 = sand.u32 %s40, 1
        %s138 = scalar_lea.sflag [#allocation3], %s137
        %s139 = sand.u32 %s40, 1
        %s140 = smul.addr %s139, 8
        %s141 = scalar_lea.vmem [#allocation2], %s140
        %p142 = pneg %p53
        %p143 = pneg %p50
        %p144 = pneg %p81
        %p145 = pneg %p78
        %s146 = sand.u32 %s68, 1
        %s147 = scalar_lea.sflag [#allocation4], %s146
        %s148 = sand.u32 %s68, 1
        %s149 = smul.addr %s148, 8
        %s150 = scalar_lea.vmem [#allocation5], %s149
        %s151 = smul.u32 2, %s22
        %s152 = smul.u32 2, %s22
        %v153 = vld [vmem:[%s132] sm:$0xff]
        %v154 = vadd.f32 %v153, 1.0
        %v155 = vmul.f32 %v153, %v153
        %v156 = vmul.f32 %v155, 0.5
        %v157 = vadd.f32 %v154, %v156
        %v159 = vcombine.high %v157, %v157
        %vm161 = vcmask 1043456
        %v162 = vsel %vm161, %v157, 0.0
        %v163 = vrot.slane %v162, 4
        %v164 = vadd.f32 %v162, %v163
        %v165 = vrot.slane %v164, 2
        %v166 = vadd.f32 %v164, %v165
        %v167 = vrot.slane %v166, 1
        %v168 = vadd.f32 %v166, %v167
        %v169 = vsel %vm161, %v159, 0.0
        %v170 = vrot.slane %v169, 4
        %v171 = vadd.f32 %v169, %v170
        %v172 = vrot.slane %v171, 2
        %v173 = vadd.f32 %v171, %v172
        %v174 = vrot.slane %v173, 1
        %v175 = vadd.f32 %v173, %v174
        %v176 = vrcp.pop %v168
        %v177 = vrcp.pop %v175
        %v178 = vmul.f32 %v168, %v176
        %v179 = vmul.f32 %v175, %v177
        %v180 = vsub.f32 2.0, %v178
        %v181 = vsub.f32 2.0, %v179
        %v182 = vmul.f32 %v176, %v180
        %v183 = vmul.f32 %v177, %v181
        %v186 = vcombine.low %v182, %v183
        %v188 = vmul.f32 %v157, %v186
        %189 = vst [vmem:[%s150] sm:$0xff] %v188
        %s190 = sand.u32 %s68, 1
        %s191 = scalar_lea.sflag [#allocation4], %s190
        %s192 = sand.u32 %s68, 1
        %s193 = smul.addr %s192, 8
        %s194 = scalar_lea.vmem [#allocation5], %s193
        // Predicated region
        $region29: #{tpu_custom_call.1} parent=23 // pred_check
          %p195 = pneg %p78
        $region30: #{tpu_custom_call.1} parent=23 // pred_check_branch
          %197 = sbr.rel (%p195) target = $region32
        $region31: #{tpu_custom_call.1} parent=23 // pred_region
          %s198 = smul.u32 2, %s22
          %s200 = ssub.s32 128, 128
          %201 = vsyncadd %s191, %s200
          %s202 = smul.addr %s23, 2
          %s203 = sadd.s32 %s198, %s202
          %s204 = smul.addr %s203, 64
          %s205 = scalar_lea.hbm %s1, %s204
          %s207 = sshll.u32 %s194, 4
          %s208 = int_to_ptr.vmem [resolvable:$true] %s207
          %210 = dma.vmem_to_hbm [thread:$0]  %s208, 128, %s205, %s191
        $region32: #{tpu_custom_call.1} parent=23 // pred_fallthru
          _
      $region24: #{tpu_custom_call.1} parent=5 // pred_fallthru
        _
      %p211 = scmp.le.s32.totalorder 2, %s13
      // Predicated region
      $region33: #{tpu_custom_call.1} parent=5 // pred_check
        %p212 = pneg %p211
      $region34: #{tpu_custom_call.1} parent=5 // pred_check_branch
        %214 = sbr.rel (%p212) target = $region36
      $region35: #{tpu_custom_call.1} parent=5 // pred_region
        %s215 = ssub.s32 %s13, 2
        // Predicated region
        $region37: #{tpu_custom_call.1} parent=35 // pred_check
          %p216 = pneg %p84
        $region38: #{tpu_custom_call.1} parent=35 // pred_check_branch
          %218 = sbr.rel (%p216) target = $region40
        $region39: #{tpu_custom_call.1} parent=35 // pred_region
          %s219 = sand.u32 %s69, 1
          %s220 = scalar_lea.sflag [#allocation4], %s219
          %s221 = sand.u32 %s69, 1
          %s222 = smul.addr %s221, 8
          %s223 = scalar_lea.vmem [#allocation5], %s222
          %224 = dma.done %s220, 128
        $region40: #{tpu_custom_call.1} parent=35 // pred_fallthru
          _
      $region36: #{tpu_custom_call.1} parent=5 // pred_fallthru
        _
    $region6: #{tpu_custom_call.1} parent=1 // loop_footer
      %s17 = sadd.s32 1, %s13
    $region7: #{tpu_custom_call.1} parent=1 // loop_footer_branch
      %12 = sbr.rel target = $region3
    $region8: #{tpu_custom_call.1} parent=1 // loop_exit
      _
    %225 = vsyncpa [#allocation3], 1
    %s226 = scalar_lea.sflag [#allocation3], 1
    %227 = vsyncpa %s226, 1
    %228 = vsyncpa [#allocation4], 1
    %s229 = scalar_lea.sflag [#allocation4], 1
    %230 = vsyncpa %s229, 1

</llo_original>
